<compile_context>
chip_gen: v5e
topology: v5e:2x2
jax: 0.10.0
libtpu: 0.0.40
codegen_flags: <defaults>
</compile_context>

<pallas_src>
import math
import functools

import jax
import jax.numpy as jnp
from jax.experimental import pallas as pl
from jax.experimental.pallas import tpu as pltpu


# ----------------------------- kernels ------------------------------------ #

def _pe_add_kernel(x_ref, pe_ref, o_ref):
    # Works for both the tiled path (x_ref/pe_ref: (tS, E)) and the
    # single-block path (x_ref: (B, S, E), pe_ref: (S, E)) via broadcasting.
    o_ref[...] = (x_ref[...] + pe_ref[...]).astype(o_ref.dtype)


def _pe_add_dropout_kernel(x_ref, pe_ref, bits_ref, o_ref, *, threshold, scale):
    # Inverted dropout: keep w.p. (1 - rate), scale survivors by 1/(1-rate).
    # Integer threshold compare on raw uint32 bits: no shift / int->float
    # convert / multiply per element.  Compute stays in x's dtype (no f32
    # upcast), so bf16 inputs keep full vreg density on v6e/v7x.
    y = x_ref[...] + pe_ref[...]
    keep = bits_ref[...] >= jnp.uint32(threshold)
    o_ref[...] = jnp.where(keep, y * scale, 0.0).astype(o_ref.dtype)


# ----------------------------- wrapper ------------------------------------ #

def build_pe(max_len, embedding_size, dtype=jnp.float32):
    """Same buffer construction as the PyTorch __init__."""
    position = jnp.arange(max_len, dtype=jnp.float32)[:, None]            # (L, 1)
    div_term = jnp.exp(
        jnp.arange(0, embedding_size, 2, dtype=jnp.float32)
        * (-math.log(10000.0) / embedding_size))                          # (E/2,)
    pe = jnp.zeros((max_len, embedding_size), jnp.float32)
    pe = pe.at[:, 0::2].set(jnp.sin(position * div_term))
    pe = pe.at[:, 1::2].set(jnp.cos(position * div_term))
    return pe.astype(dtype)


def _dropout_threshold(rate):
    # keep iff bits >= rate * 2^32  ==>  P(keep) = 1 - rate (to within 2^-32).
    return min(int(round(float(rate) * 4294967296.0)), 4294967295)


def _choose_seq_tile(S, E, itemsize, tile_target_bytes):
    """Largest multiple-of-8 row count whose (rows, E) block fits the budget."""
    rows = tile_target_bytes // max(1, E * itemsize)
    rows = max(8, (rows // 8) * 8)
    return S if rows >= S else int(rows)


def positional_embedding(x, pe, *, dropout_rate=0.1, training=False,
                         rng_key=None,
                         small_limit_bytes=256 * 1024,
                         tile_target_bytes=1 << 20):
    """dropout(x + pe[:S]) with x of shape (..., S, E), pe of shape (L, E).

    tile_target_bytes (~1 MiB per-array block) keeps double-buffered VMEM use
    well under the scoped defaults on v5e (16 MiB) / v6e (32 MiB) / v7x (32 MiB).
    """
    orig_shape = x.shape
    S, E = x.shape[-2], x.shape[-1]
    B = int(math.prod(x.shape[:-2]))
    x3 = x.reshape(B, S, E)
    p = pe[:S].astype(x.dtype)            # static slice / cast: plain-JAX glue

    use_dropout = bool(training) and float(dropout_rate) > 0.0
    if use_dropout:
        if rng_key is None:
            rng_key = jax.random.PRNGKey(0)
        # TODO(synk): on real TPU hardware the mask bits could be generated
        # in-kernel with pltpu.prng_seed / pltpu.prng_random_bits (removes one
        # full HBM read of bits); the CPU interpret harness has no lowering for
        # the TPU PRNG, so bits are generated host-side and streamed in.
        bits = jax.random.bits(rng_key, (B, S, E), dtype=jnp.uint32)
        kernel = functools.partial(
            _pe_add_dropout_kernel,
            threshold=_dropout_threshold(dropout_rate),
            scale=1.0 / (1.0 - float(dropout_rate)))

    itemsize = jnp.dtype(x.dtype).itemsize
    total_bytes = B * S * E * itemsize
    out_shape = jax.ShapeDtypeStruct((B, S, E), x.dtype)

    if total_bytes <= small_limit_bytes:
        # Tiny input: a single grid step (per-step overhead ~0.35 us would
        # dominate otherwise), whole tensor as one block.
        # TODO(synk): when E < 128 the stores are lane-masked; for tiny inputs
        # this is negligible, for big inputs E is normally a multiple of 128.
        x_spec = pl.BlockSpec((B, S, E), lambda i: (0, 0, 0))
        pe_spec = pl.BlockSpec((S, E), lambda i: (0, 0))
        if use_dropout:
            out = pl.pallas_call(
                kernel, out_shape=out_shape, grid=(1,),
                in_specs=[x_spec, pe_spec,
                          pl.BlockSpec((B, S, E), lambda i: (0, 0, 0))],
                out_specs=x_spec,
            )(x3, p, bits)
        else:
            out = pl.pallas_call(
                _pe_add_kernel, out_shape=out_shape, grid=(1,),
                in_specs=[x_spec, pe_spec],
                out_specs=x_spec,
            )(x3, p)
        return out.reshape(orig_shape)

    # Tiled path: grid = (S-tiles, B).  S-tiles outer / B inner so pe's block
    # index (s only) is unchanged across the inner loop -> no pe re-DMA.
    # Both axes are "parallel": independent elementwise work, so v7x's two
    # TensorCores can split the grid (no-op on v5e/v6e).
    tS = _choose_seq_tile(S, E, itemsize, tile_target_bytes)
    grid = (pl.cdiv(S, tS), B)
    x_spec = pl.BlockSpec((None, tS, E), lambda s, b: (b, s, 0))
    pe_spec = pl.BlockSpec((tS, E), lambda s, b: (s, 0))
    cparams = pltpu.CompilerParams(dimension_semantics=("parallel", "parallel"))
    if use_dropout:
        out = pl.pallas_call(
            kernel, out_shape=out_shape, grid=grid,
            in_specs=[x_spec, pe_spec,
                      pl.BlockSpec((None, tS, E), lambda s, b: (b, s, 0))],
            out_specs=x_spec,
            compiler_params=cparams,
        )(x3, p, bits)
    else:
        out = pl.pallas_call(
            _pe_add_kernel, out_shape=out_shape, grid=grid,
            in_specs=[x_spec, pe_spec],
            out_specs=x_spec,
            compiler_params=cparams,
        )(x3, p)
    return out.reshape(orig_shape)


# ------------------------------- main -------------------------------------- #

if __name__ == "__main__":
    root = jax.random.PRNGKey(0)
    k1, k2, k3, k4 = jax.random.split(root, 4)
    rate = 0.1

    # --- Test 1: tiny shapes -> single-block path --------------------------- #
    B, S, E = 2, 8, 32
    max_len = 64
    x = jax.random.normal(k1, (B, S, E), dtype=jnp.float32)
    pe = build_pe(max_len, E)
    ref = x + pe[:S][None, :, :]

    out_eval = jax.block_until_ready(
        positional_embedding(x, pe, dropout_rate=rate, training=False))
    assert out_eval.shape == (B, S, E)
    assert jnp.allclose(out_eval, ref, atol=1e-6), "eval-mode mismatch (small)"

    out_train = jax.block_until_ready(
        positional_embedding(x, pe, dropout_rate=rate, training=True,
                             rng_key=k2))
    bits = jax.random.bits(k2, (B, S, E), dtype=jnp.uint32)
    keep = bits >= jnp.uint32(_dropout_threshold(rate))
    expected = jnp.where(keep, ref * (1.0 / (1.0 - rate)), 0.0)
    assert jnp.allclose(out_train, expected, atol=1e-5), \
        "train-mode mismatch (small)"

    # --- Test 2: force the tiled path (2 S-tiles x 2 batches) --------------- #
    B2, S2, E2 = 2, 64, 128
    x2 = jax.random.normal(k3, (B2, S2, E2), dtype=jnp.float32)
    pe2 = build_pe(128, E2)
    ref2 = x2 + pe2[:S2][None, :, :]
    tiled_kwargs = dict(small_limit_bytes=0, tile_target_bytes=32 * E2 * 4)

    out2_eval = jax.block_until_ready(
        positional_embedding(x2, pe2, dropout_rate=rate, training=False,
                             **tiled_kwargs))
    assert jnp.allclose(out2_eval, ref2, atol=1e-6), "eval-mode mismatch (tiled)"

    out2_train = jax.block_until_ready(
        positional_embedding(x2, pe2, dropout_rate=rate, training=True,
                             rng_key=k4, **tiled_kwargs))
    bits2 = jax.random.bits(k4, (B2, S2, E2), dtype=jnp.uint32)
    keep2 = bits2 >= jnp.uint32(_dropout_threshold(rate))
    expected2 = jnp.where(keep2, ref2 * (1.0 / (1.0 - rate)), 0.0)
    assert jnp.allclose(out2_train, expected2, atol=1e-5), \
        "train-mode mismatch (tiled)"

    print("KERNEL_OK")
</pallas_src>

<mosaic_0001>
module attributes {stable_mosaic.version = 11 : i64} {
  func.func @_pe_add_kernel(%arg0: i32, %arg1: memref<2x8x32xf32, #tpu.memory_space<vmem>>, %arg2: memref<8x32xf32, #tpu.memory_space<vmem>>, %arg3: memref<2x8x32xf32, #tpu.memory_space<vmem>>) attributes {dimension_semantics = [#tpu.dimension_semantics<arbitrary>], iteration_bounds = array<i64: 1>, scalar_prefetch = 0 : i64, scratch_operands = 0 : i64, tpu.core_type = #tpu.core_type<tc>, window_params = [{pipeline_mode = #tpu.pipeline_mode<synchronous>, transform_indices = @transform_0, window_bounds = array<i64: 2, 8, 32>}, {pipeline_mode = #tpu.pipeline_mode<synchronous>, transform_indices = @transform_1, window_bounds = array<i64: 8, 32>}, {pipeline_mode = #tpu.pipeline_mode<synchronous>, transform_indices = @transform_2, window_bounds = array<i64: 2, 8, 32>}]} {
    %c0 = arith.constant 0 : index
    %c0_0 = arith.constant 0 : index
    %c0_1 = arith.constant 0 : index
    %0 = vector.load %arg1[%c0, %c0_0, %c0_1] : memref<2x8x32xf32, #tpu.memory_space<vmem>>, vector<2x8x32xf32>
    %c0_2 = arith.constant 0 : index
    %c0_3 = arith.constant 0 : index
    %1 = vector.load %arg2[%c0_2, %c0_3] : memref<8x32xf32, #tpu.memory_space<vmem>>, vector<8x32xf32>
    %2 = vector.shape_cast %1 : vector<8x32xf32> to vector<1x8x32xf32>
    %3 = vector.broadcast %2 : vector<1x8x32xf32> to vector<2x8x32xf32>
    %4 = arith.addf %0, %3 : vector<2x8x32xf32>
    %c0_4 = arith.constant 0 : index
    %c0_5 = arith.constant 0 : index
    %c0_6 = arith.constant 0 : index
    %5 = vector.load %arg3[%c0_4, %c0_5, %c0_6] : memref<2x8x32xf32, #tpu.memory_space<vmem>>, vector<2x8x32xf32>
    tpu.vector_store %arg3[%c0_4, %c0_5, %c0_6], %4 {strides = array<i32>} : memref<2x8x32xf32, #tpu.memory_space<vmem>>, vector<2x8x32xf32>,
    return
  }
  func.func @transform_0(%arg0: i32) -> (i32, i32, i32) {
    %c0_i32 = arith.constant 0 : i32
    %c0_i32_0 = arith.constant 0 : i32
    %c0_i32_1 = arith.constant 0 : i32
    %c0_i32_2 = arith.constant 0 : i32
    return %c0_i32, %c0_i32_0, %c0_i32_1 : i32, i32, i32
  }
  func.func @transform_1(%arg0: i32) -> (i32, i32) {
    %c0_i32 = arith.constant 0 : i32
    %c0_i32_0 = arith.constant 0 : i32
    %c0_i32_1 = arith.constant 0 : i32
    return %c0_i32, %c0_i32_0 : i32, i32
  }
  func.func @transform_2(%arg0: i32) -> (i32, i32, i32) {
    %c0_i32 = arith.constant 0 : i32
    %c0_i32_0 = arith.constant 0 : i32
    %c0_i32_1 = arith.constant 0 : i32
    %c0_i32_2 = arith.constant 0 : i32
    return %c0_i32, %c0_i32_0, %c0_i32_1 : i32, i32, i32
  }
}

</mosaic_0001>

<llo_original>
// kernel: tpu_custom_call.1
$region0: #{tpu_custom_call.1}
  #allocation0 [shape = 'u32[]', space=smem, size = 0x4, offset = 0x4, fixed_abs, tag = 'smem constant byte address 0x4 - core index']
  #allocation1 [shape = 'u32[72,128]{1,0:T(1,128)}', space=vmem, size = 0x9000, scoped, tag = 'internal scratch']
  %s0 = inlined_call_operand.hbm [shape: f32[2,8,32], index: 0, kind: input, shape index: {}]
  %s1 = inlined_call_operand.hbm [shape: f32[8,32], index: 1, kind: input, shape index: {}]
  %s2 = inlined_call_operand.hbm [shape: f32[2,8,32], index: 2, kind: output, shape index: {}]
  %s3 = sld [smem:[#allocation0]]
  $region26: #{tpu_custom_call.1} parent=0
    _
  %s5 = ssub.s32 1, %s3
  %s6 = scalar_select 0, %s5, %s3
  $region1: #{tpu_custom_call.1} parent=0
    #allocation2 [shape = 'u8[8192]{0}', space=vmem, size = 0x2000, scoped, tag = 'input window, operand 0, single buffered']
    #allocation3 [shape = 's32[1]{0}', space=sflag, size = 0x4, scoped, tag = 'scoped memory for tpu_custom_call.1']
    #allocation4 [shape = 's32[1]{0}', space=sflag, size = 0x4, scoped, tag = 'scoped memory for tpu_custom_call.1']
    #allocation5 [shape = 'u8[4096]{0}', space=vmem, size = 0x1000, scoped, tag = 'input window, operand 1, single buffered']
    #allocation6 [shape = 's32[1]{0}', space=sflag, size = 0x4, scoped, tag = 'scoped memory for tpu_custom_call.1']
    #allocation7 [shape = 'u8[8192]{0}', space=vmem, size = 0x2000, scoped, tag = 'output window, operand 0, single buffered']
    %7 = vsyncpa [#allocation3], 0
    %8 = vsyncpa [#allocation6], 0
    %9 = vsyncpa [#allocation4], 0
    // Predicated region
    $region2: #{tpu_custom_call.1} parent=1 // pred_check
      _
    $region3: #{tpu_custom_call.1} parent=1 // pred_check_branch
      %11 = sbr.rel (0) target = $region5
    $region4: #{tpu_custom_call.1} parent=1 // pred_region
      %13 = vsyncadd [#allocation3], 0
      %s14 = sshll.u32 %s0, 4
      %s15 = int_to_ptr.hbm [resolvable:$true] %s14
      %s16 = sshll.u32 [#allocation2], 4
      %s17 = int_to_ptr.vmem [resolvable:$true] %s16
      %22 = dma.hbm_to_vmem [thread:$0]  %s15, 256, %s17, [#allocation3], 128, 128, 8
    $region5: #{tpu_custom_call.1} parent=1 // pred_fallthru
      _
    // Predicated region
    $region6: #{tpu_custom_call.1} parent=1 // pred_check
      _
    $region7: #{tpu_custom_call.1} parent=1 // pred_check_branch
      %24 = sbr.rel (0) target = $region9
    $region8: #{tpu_custom_call.1} parent=1 // pred_region
      %26 = vsyncadd [#allocation6], 0
      %s28 = sshll.u32 %s1, 4
      %s29 = int_to_ptr.hbm [resolvable:$true] %s28
      %s30 = sshll.u32 [#allocation5], 4
      %s31 = int_to_ptr.vmem [resolvable:$true] %s30
      %33 = dma.hbm_to_vmem [thread:$0]  %s29, 128, %s31, [#allocation6]
    $region9: #{tpu_custom_call.1} parent=1 // pred_fallthru
      _
    // Predicated region
    $region10: #{tpu_custom_call.1} parent=1 // pred_check
      _
    $region11: #{tpu_custom_call.1} parent=1 // pred_check_branch
      %35 = sbr.rel (0) target = $region13
    $region12: #{tpu_custom_call.1} parent=1 // pred_region
      %37 = dma.done [#allocation3], 256
    $region13: #{tpu_custom_call.1} parent=1 // pred_fallthru
      _
    // Predicated region
    $region14: #{tpu_custom_call.1} parent=1 // pred_check
      _
    $region15: #{tpu_custom_call.1} parent=1 // pred_check_branch
      %39 = sbr.rel (0) target = $region17
    $region16: #{tpu_custom_call.1} parent=1 // pred_region
      %41 = dma.done [#allocation6], 128
    $region17: #{tpu_custom_call.1} parent=1 // pred_fallthru
      _
    %v42 = vld [vmem:[#allocation2] sm:$0xff]
    %v43 = vld [vmem:[#allocation2 + $0x8] sm:$0xff]
    %v44 = vld [vmem:[#allocation5] sm:$0xff]
    %v45 = vadd.f32 %v42, %v44
    %v46 = vadd.f32 %v43, %v44
    %vm47 = vcmask 261120
    %48 = vst.msk [vmem:[#allocation7] sm:$0xff] %vm47, %v45
    %49 = vst.msk [vmem:[#allocation7 + $0x8] sm:$0xff] %vm47, %v46
    // Predicated region
    $region18: #{tpu_custom_call.1} parent=1 // pred_check
      _
    $region19: #{tpu_custom_call.1} parent=1 // pred_check_branch
      %51 = sbr.rel (0) target = $region21
    $region20: #{tpu_custom_call.1} parent=1 // pred_region
      %53 = vsyncadd [#allocation4], 0
      %s54 = sshll.u32 [#allocation7], 4
      %s55 = int_to_ptr.vmem [resolvable:$true] %s54
      %s56 = sshll.u32 %s2, 4
      %s57 = int_to_ptr.hbm [resolvable:$true] %s56
      %62 = dma.vmem_to_hbm [thread:$0]  %s55, 256, %s57, [#allocation4], 128, 128, 8
    $region21: #{tpu_custom_call.1} parent=1 // pred_fallthru
      _
    // Predicated region
    $region22: #{tpu_custom_call.1} parent=1 // pred_check
      _
    $region23: #{tpu_custom_call.1} parent=1 // pred_check_branch
      %64 = sbr.rel (0) target = $region25
    $region24: #{tpu_custom_call.1} parent=1 // pred_region
      %66 = dma.done [#allocation4], 256
    $region25: #{tpu_custom_call.1} parent=1 // pred_fallthru
      _
    %67 = vsyncpa [#allocation3], 1
    %68 = vsyncpa [#allocation6], 1
    %69 = vsyncpa [#allocation4], 1

</llo_original>
